<compile_context>
chip_gen: v7x
topology: tpu7x:2x2x1
jax: 0.10.0
libtpu: 0.0.40
codegen_flags: <defaults>
</compile_context>

<pallas_src>
import functools

import jax
import jax.numpy as jnp
from jax.experimental import pallas as pl
from jax.experimental.pallas import tpu as pltpu


def _image_proj_kernel(x_ref, w_ref, b_ref, gamma_ref, beta_ref, o_ref,
                       *, cross_dim, eps):
    # x_ref:     (B, D_in)  bf16  (pinned across grid steps)
    # w_ref:     (D_in, C)  bf16  (token t's contiguous weight slab)
    # b_ref:     (1, C)     f32   (token t's bias)
    # gamma_ref: (1, C)     f32   (pinned)
    # beta_ref:  (1, C)     f32   (pinned)
    # o_ref:     (B, C)     out dtype (bf16 by default)
    y = jnp.dot(x_ref[...], w_ref[...],
                preferred_element_type=jnp.float32) + b_ref[...]   # (B, C) f32

    # Two-pass LayerNorm statistics in f32 (VPU/XLU are idle vs the W DMA,
    # so the extra pass is free and avoids E[y^2]-mean^2 cancellation).
    inv_c = jnp.float32(1.0 / cross_dim)
    mean = jnp.sum(y, axis=-1, keepdims=True) * inv_c
    centered = y - mean
    var = jnp.sum(centered * centered, axis=-1, keepdims=True) * inv_c
    y_norm = centered * jax.lax.rsqrt(var + eps)

    o_ref[...] = (y_norm * gamma_ref[...] + beta_ref[...]).astype(o_ref.dtype)


def prepare_image_proj_params(w, b, gamma, beta,
                              *, clip_extra_context_tokens,
                              cross_attention_dim):
    """One-time (init/load-time) parameter preparation.

    w:     (clip_embeddings_dim, tokens * cross_dim)   == PyTorch proj.weight.T
    b:     (tokens * cross_dim,)
    gamma: (cross_dim,)   beta: (cross_dim,)

    Returns params laid out for the kernel:
      w3:  (tokens, d_in, cross_dim) bf16   -- contiguous per-token DMA slab
      b3:  (tokens, 1, cross_dim)    f32
      g2:  (1, cross_dim)            f32
      be2: (1, cross_dim)            f32
    Doing the bf16 cast + relayout here keeps it OFF the per-call hot path.
    """
    tokens = clip_extra_context_tokens
    cdim = cross_attention_dim
    d_in = w.shape[0]
    assert w.shape == (d_in, tokens * cdim), w.shape
    w3 = (w.reshape(d_in, tokens, cdim)
            .transpose(1, 0, 2)
            .astype(jnp.bfloat16))                       # (T, D_in, C) bf16
    b3 = b.reshape(tokens, 1, cdim).astype(jnp.float32)  # (T, 1, C)
    g2 = gamma.reshape(1, cdim).astype(jnp.float32)
    be2 = beta.reshape(1, cdim).astype(jnp.float32)
    return w3, b3, g2, be2


def image_proj_model(image_embeds, params,
                     *, clip_extra_context_tokens, cross_attention_dim,
                     eps=1e-5, out_dtype=jnp.bfloat16):
    """JAX/Pallas equivalent of ImageProjModel.forward.

    image_embeds: (B, clip_embeddings_dim)   any float dtype
    params:       output of prepare_image_proj_params (bf16 W required)
    returns:      (B, tokens, cross_dim) in out_dtype (bf16 default)
    """
    w3, b3, g2, be2 = params
    bsz, d_in = image_embeds.shape
    tokens = clip_extra_context_tokens
    cdim = cross_attention_dim
    assert w3.shape == (tokens, d_in, cdim), w3.shape
    # Hot path requires the pre-cast bf16 weight (no per-call cast/copy).
    assert w3.dtype == jnp.bfloat16, "prepare params once with prepare_image_proj_params"
    # Lane-dense tiles require the LayerNorm width to be a lane multiple
    # (true for all real IP-Adapter configs: 768 / 1024 / 2048 ...).
    assert cdim % 128 == 0, "cross_attention_dim must be a multiple of 128"

    x_bf = image_embeds.astype(jnp.bfloat16)
    out_itemsize = jnp.dtype(out_dtype).itemsize

    kernel = functools.partial(_image_proj_kernel, cross_dim=cdim, eps=eps)

    # Scoped-VMEM budget: double-buffered W slab dominates; add pinned x,
    # double-buffered small params and output, plus headroom.  Floor at the
    # 32 MiB default (raises v5e's 16 MiB default), cap well under physical.
    vmem_need = (2 * d_in * cdim * 2          # W slab double buffer (bf16)
                 + 2 * bsz * d_in * 2         # x (pinned, conservatively x2)
                 + 2 * 3 * cdim * 4           # b / gamma / beta tiles
                 + 2 * bsz * cdim * out_itemsize)
    vmem_limit = int(min(max(vmem_need + (4 << 20), 32 << 20), 100 << 20))

    bytes_accessed = (x_bf.size * 2 + w3.size * 2
                      + (b3.size + g2.size + be2.size) * 4
                      + bsz * tokens * cdim * out_itemsize)
    cost = pl.CostEstimate(flops=2 * bsz * d_in * tokens * cdim,
                           transcendentals=0,
                           bytes_accessed=bytes_accessed)

    out = pl.pallas_call(
        kernel,
        out_shape=jax.ShapeDtypeStruct((bsz, tokens * cdim), out_dtype),
        grid=(tokens,),
        in_specs=[
            pl.BlockSpec((bsz, d_in), lambda t: (0, 0)),                 # x (pinned)
            pl.BlockSpec((pl.Squeezed(), d_in, cdim), lambda t: (t, 0, 0)),  # W[t] slab
            pl.BlockSpec((pl.Squeezed(), 1, cdim), lambda t: (t, 0, 0)),     # bias[t]
            pl.BlockSpec((1, cdim), lambda t: (0, 0)),                   # gamma (pinned)
            pl.BlockSpec((1, cdim), lambda t: (0, 0)),                   # beta (pinned)
        ],
        out_specs=pl.BlockSpec((bsz, cdim), lambda t: (0, t)),
        compiler_params=pltpu.CompilerParams(
            dimension_semantics=("parallel",),
            vmem_limit_bytes=vmem_limit),
        cost_estimate=cost,
    )(x_bf, w3, b3, g2, be2)

    # (B, T*C) -> (B, T, C) is a free row-major reinterpretation (metadata only).
    return out.reshape(bsz, tokens, cdim)


def _reference(image_embeds, w, b, gamma, beta, tokens, cdim, eps=1e-5):
    # Matches the kernel's matmul numerics (bf16 MXU inputs, f32 accumulate)
    # with f32 two-pass LayerNorm; kernel output is additionally bf16-rounded.
    x = image_embeds.astype(jnp.bfloat16).astype(jnp.float32)
    wf = w.astype(jnp.bfloat16).astype(jnp.float32)
    y = x @ wf + b
    y = y.reshape(-1, tokens, cdim)
    mean = jnp.mean(y, axis=-1, keepdims=True)
    var = jnp.mean((y - mean) ** 2, axis=-1, keepdims=True)
    return (y - mean) * jax.lax.rsqrt(var + eps) * gamma + beta


if __name__ == "__main__":
    # Small, TPU-friendly shapes consistent with the module's forward pass.
    batch = 2
    clip_embeddings_dim = 256
    cross_attention_dim = 128
    clip_extra_context_tokens = 4

    key = jax.random.PRNGKey(0)
    k_x, k_w, k_b, k_g, k_be = jax.random.split(key, 5)

    image_embeds = jax.random.normal(
        k_x, (batch, clip_embeddings_dim), dtype=jnp.float32)

    # Deterministic synthetic parameters (Linear + LayerNorm shapes from __init__).
    out_dim = clip_extra_context_tokens * cross_attention_dim
    w = jax.random.normal(k_w, (clip_embeddings_dim, out_dim),
                          dtype=jnp.float32) * 0.02
    b = jax.random.normal(k_b, (out_dim,), dtype=jnp.float32) * 0.02
    gamma = jnp.ones((cross_attention_dim,), dtype=jnp.float32) \
        + 0.01 * jax.random.normal(k_g, (cross_attention_dim,), jnp.float32)
    beta = 0.01 * jax.random.normal(k_be, (cross_attention_dim,), jnp.float32)

    # One-time parameter prep (bf16 cast + per-token contiguous layout).
    params = prepare_image_proj_params(
        w, b, gamma, beta,
        clip_extra_context_tokens=clip_extra_context_tokens,
        cross_attention_dim=cross_attention_dim)

    out = image_proj_model(
        image_embeds, params,
        clip_extra_context_tokens=clip_extra_context_tokens,
        cross_attention_dim=cross_attention_dim)
    out = jax.block_until_ready(out)

    ref = _reference(image_embeds, w, b, gamma, beta,
                     clip_extra_context_tokens, cross_attention_dim)

    assert out.shape == (batch, clip_extra_context_tokens, cross_attention_dim)
    # Output is bf16 by design; compare in f32 with bf16-rounding tolerance.
    err = jnp.max(jnp.abs(out.astype(jnp.float32) - ref))
    assert jnp.allclose(out.astype(jnp.float32), ref, atol=3e-2, rtol=3e-2), \
        f"max err {err}"

    print("KERNEL_OK")
</pallas_src>

<mosaic_0001>
module attributes {stable_mosaic.version = 11 : i64} {
  func.func @_image_proj_kernel(%arg0: i32, %arg1: memref<2x256xbf16, #tpu.memory_space<vmem>>, %arg2: memref<1x256x128xbf16, #tpu.memory_space<vmem>>, %arg3: memref<1x1x128xf32, #tpu.memory_space<vmem>>, %arg4: memref<1x128xf32, #tpu.memory_space<vmem>>, %arg5: memref<1x128xf32, #tpu.memory_space<vmem>>, %arg6: memref<2x128xbf16, #tpu.memory_space<vmem>>) attributes {dimension_semantics = [#tpu.dimension_semantics<parallel>], iteration_bounds = array<i64: 4>, scalar_prefetch = 0 : i64, scratch_operands = 0 : i64, tpu.core_type = #tpu.core_type<tc>, window_params = [{pipeline_mode = #tpu.pipeline_mode<synchronous>, transform_indices = @transform_0, window_bounds = array<i64: 2, 256>}, {transform_indices = @transform_1, window_bounds = array<i64: 1, 256, 128>}, {transform_indices = @transform_2, window_bounds = array<i64: 1, 1, 128>}, {pipeline_mode = #tpu.pipeline_mode<synchronous>, transform_indices = @transform_3, window_bounds = array<i64: 1, 128>}, {pipeline_mode = #tpu.pipeline_mode<synchronous>, transform_indices = @transform_4, window_bounds = array<i64: 1, 128>}, {transform_indices = @transform_5, window_bounds = array<i64: 2, 128>}]} {
    %c0 = arith.constant 0 : index
    %c0_0 = arith.constant 0 : index
    %0 = vector.load %arg1[%c0, %c0_0] : memref<2x256xbf16, #tpu.memory_space<vmem>>, vector<2x256xbf16>
    %c0_1 = arith.constant 0 : index
    %c0_2 = arith.constant 0 : index
    %c0_3 = arith.constant 0 : index
    %1 = vector.load %arg2[%c0_1, %c0_2, %c0_3] : memref<1x256x128xbf16, #tpu.memory_space<vmem>>, vector<1x256x128xbf16>
    %2 = vector.shape_cast %1 : vector<1x256x128xbf16> to vector<256x128xbf16>
    %cst = arith.constant dense<0.000000e+00> : vector<2x128xf32>
    %3 = tpu.matmul %0, %2, %cst {dimension_numbers = #tpu.dot_dimension_numbers<[1], [0], [0], [1], [0, 0, 1, 1], [], []>} : vector<2x256xbf16>, vector<256x128xbf16>, vector<2x128xf32> -> vector<2x128xf32>
    %c0_4 = arith.constant 0 : index
    %c0_5 = arith.constant 0 : index
    %c0_6 = arith.constant 0 : index
    %4 = vector.load %arg3[%c0_4, %c0_5, %c0_6] : memref<1x1x128xf32, #tpu.memory_space<vmem>>, vector<1x1x128xf32>
    %5 = vector.shape_cast %4 : vector<1x1x128xf32> to vector<1x128xf32>
    %6 = vector.broadcast %5 : vector<1x128xf32> to vector<2x128xf32>
    %7 = arith.addf %3, %6 : vector<2x128xf32>
    %cst_7 = arith.constant dense<0.000000e+00> : vector<2xf32>
    %8 = vector.multi_reduction <add>, %7, %cst_7 [1] : vector<2x128xf32> to vector<2xf32>
    %9 = vector.shape_cast %8 : vector<2xf32> to vector<2x1xf32>
    %cst_8 = arith.constant 7.812500e-03 : f32
    %10 = vector.broadcast %cst_8 : f32 to vector<2x1xf32>
    %11 = arith.mulf %9, %10 : vector<2x1xf32>
    %12 = vector.broadcast %11 : vector<2x1xf32> to vector<2x128xf32>
    %13 = arith.subf %7, %12 : vector<2x128xf32>
    %14 = arith.mulf %13, %13 : vector<2x128xf32>
    %cst_9 = arith.constant dense<0.000000e+00> : vector<2xf32>
    %15 = vector.multi_reduction <add>, %14, %cst_9 [1] : vector<2x128xf32> to vector<2xf32>
    %16 = vector.shape_cast %15 : vector<2xf32> to vector<2x1xf32>
    %cst_10 = arith.constant 7.812500e-03 : f32
    %17 = vector.broadcast %cst_10 : f32 to vector<2x1xf32>
    %18 = arith.mulf %16, %17 : vector<2x1xf32>
    %cst_11 = arith.constant 9.99999974E-6 : f32
    %19 = vector.broadcast %cst_11 : f32 to vector<2x1xf32>
    %20 = arith.addf %18, %19 : vector<2x1xf32>
    %21 = math.rsqrt %20 : vector<2x1xf32>
    %22 = vector.broadcast %21 : vector<2x1xf32> to vector<2x128xf32>
    %23 = arith.mulf %13, %22 : vector<2x128xf32>
    %c0_12 = arith.constant 0 : index
    %c0_13 = arith.constant 0 : index
    %24 = vector.load %arg4[%c0_12, %c0_13] : memref<1x128xf32, #tpu.memory_space<vmem>>, vector<1x128xf32>
    %25 = vector.broadcast %24 : vector<1x128xf32> to vector<2x128xf32>
    %26 = arith.mulf %23, %25 : vector<2x128xf32>
    %c0_14 = arith.constant 0 : index
    %c0_15 = arith.constant 0 : index
    %27 = vector.load %arg5[%c0_14, %c0_15] : memref<1x128xf32, #tpu.memory_space<vmem>>, vector<1x128xf32>
    %28 = vector.broadcast %27 : vector<1x128xf32> to vector<2x128xf32>
    %29 = arith.addf %26, %28 : vector<2x128xf32>
    %30 = arith.truncf %29 : vector<2x128xf32> to vector<2x128xbf16>
    %c0_16 = arith.constant 0 : index
    %c0_17 = arith.constant 0 : index
    %31 = vector.load %arg6[%c0_16, %c0_17] : memref<2x128xbf16, #tpu.memory_space<vmem>>, vector<2x128xbf16>
    tpu.vector_store %arg6[%c0_16, %c0_17], %30 {strides = array<i32>} : memref<2x128xbf16, #tpu.memory_space<vmem>>, vector<2x128xbf16>,
    return
  }
  func.func @transform_0(%arg0: i32) -> (i32, i32) {
    %c0_i32 = arith.constant 0 : i32
    %c0_i32_0 = arith.constant 0 : i32
    %c0_i32_1 = arith.constant 0 : i32
    return %c0_i32, %c0_i32_0 : i32, i32
  }
  func.func @transform_1(%arg0: i32) -> (i32, i32, i32) {
    %c0_i32 = arith.constant 0 : i32
    %c0_i32_0 = arith.constant 0 : i32
    %c0_i32_1 = arith.constant 0 : i32
    return %arg0, %c0_i32, %c0_i32_0 : i32, i32, i32
  }
  func.func @transform_2(%arg0: i32) -> (i32, i32, i32) {
    %c0_i32 = arith.constant 0 : i32
    %c0_i32_0 = arith.constant 0 : i32
    %c0_i32_1 = arith.constant 0 : i32
    return %arg0, %c0_i32, %c0_i32_0 : i32, i32, i32
  }
  func.func @transform_3(%arg0: i32) -> (i32, i32) {
    %c0_i32 = arith.constant 0 : i32
    %c0_i32_0 = arith.constant 0 : i32
    %c0_i32_1 = arith.constant 0 : i32
    return %c0_i32, %c0_i32_0 : i32, i32
  }
  func.func @transform_4(%arg0: i32) -> (i32, i32) {
    %c0_i32 = arith.constant 0 : i32
    %c0_i32_0 = arith.constant 0 : i32
    %c0_i32_1 = arith.constant 0 : i32
    return %c0_i32, %c0_i32_0 : i32, i32
  }
  func.func @transform_5(%arg0: i32) -> (i32, i32) {
    %c0_i32 = arith.constant 0 : i32
    %c0_i32_0 = arith.constant 0 : i32
    return %c0_i32, %arg0 : i32, i32
  }
}

</mosaic_0001>

<llo_original>
// kernel: tpu_custom_call.1
$region0: #{tpu_custom_call.1}
  #allocation0 [shape = 'u32[]', space=smem, size = 0x4, offset = 0x4, fixed_abs, tag = 'smem constant byte address 0x4 - core index']
  #allocation1 [shape = 'u32[144,128]{1,0:T(1,128)}', space=vmem, size = 0x12000, scoped, tag = 'internal scratch']
  %s0 = inlined_call_operand.hbm [shape: bf16[2,256], index: 0, kind: input, shape index: {}]
  %s1 = inlined_call_operand.hbm [shape: bf16[4,256,128], index: 1, kind: input, shape index: {}]
  %s2 = inlined_call_operand.vmem [shape: f32[4,1,128], index: 2, kind: input, shape index: {}]
  %s3 = inlined_call_operand.vmem [shape: f32[1,128], index: 3, kind: input, shape index: {}]
  %s4 = inlined_call_operand.vmem [shape: f32[1,128], index: 4, kind: input, shape index: {}]
  %s5 = inlined_call_operand.hbm [shape: bf16[2,512], index: 5, kind: output, shape index: {}]
  %s6 = sld [smem:[#allocation0]]
  $region61: #{tpu_custom_call.1} parent=0
    _
  %s8 = ssub.s32 1, %s6
  %s9 = scalar_select 0, %s8, %s6
  $region1: #{tpu_custom_call.1} parent=0
    #allocation2 [shape = 'u8[1024]{0}', space=vmem, size = 0x400, scoped, tag = 'input window, operand 0, single buffered']
    #allocation3 [shape = 's32[2]{0}', space=sflag, size = 0x8, scoped, tag = 'scoped memory for tpu_custom_call.1']
    #allocation4 [shape = 's32[2]{0}', space=sflag, size = 0x8, scoped, tag = 'scoped memory for tpu_custom_call.1']
    #allocation5 [shape = 'u8[131072]{0}', space=vmem, size = 0x20000, scoped, tag = 'input window, operand 1']
    #allocation6 [shape = 's32[2]{0}', space=sflag, size = 0x8, scoped, tag = 'scoped memory for tpu_custom_call.1']
    #allocation7 [shape = 'u8[1024]{0}', space=vmem, size = 0x400, scoped, tag = 'output window, operand 0']
    %10 = vsyncpa [#allocation3], 0
    %11 = vsyncpa [#allocation6], 0
    %s12 = scalar_lea.sflag [#allocation6], 1
    %13 = vsyncpa %s12, 0
    %14 = vsyncpa [#allocation4], 0
    %s15 = scalar_lea.sflag [#allocation4], 1
    %16 = vsyncpa %s15, 0
    loop: start=0, step=1, limit=6
    $region2: #{tpu_custom_call.1} parent=1 // loop_pre_header
      _
    $region3: #{tpu_custom_call.1} parent=1 // loop_header
      %s18 = sphi 0, %s22
      %p19 = scmp.ge.s32.totalorder %s18, 6
      %s26 = sphi 0, %s26
      %s28 = sphi 0, %s26
      %s29 = sphi 0, %s28
      %s43 = sphi 0, %s29
      %s49 = sphi 0, %s51
      %s52 = sphi 0, %s49
      %s53 = sphi 0, %s52
      %s69 = sphi 0, %s53
      %s75 = sphi 0, %s77
      %s78 = sphi 0, %s75
      %s79 = sphi 0, %s78
      %s95 = sphi 0, %s79
      %s99 = sphi 0, %s99
      %s101 = sphi 0, %s99
      %s102 = sphi 0, %s101
      %s116 = sphi 0, %s102
      %s120 = sphi 0, %s120
      %s122 = sphi 0, %s120
      %s123 = sphi 0, %s122
      %s137 = sphi 0, %s123
      %s143 = sphi 0, %s145
      %s146 = sphi 0, %s143
      %s147 = sphi 0, %s146
      %s163 = sphi 0, %s147
    $region4: #{tpu_custom_call.1} parent=1 // loop_header_branch
      %21 = sbr.rel (%p19) target = $region8
    $region5: #{tpu_custom_call.1} parent=1 // loop_body
      %s23 = ssub.s32 %s18, 1
      %s24 = ssub.s32 %s18, 2
      %s25 = sadd.s32 %s18, 1
      %s27 = sadd.s32 %s26, 1
      %p30 = scmp.eq.s32.totalorder %s18, 3
      %p31 = scmp.ne.s32.totalorder %s26, %s28
      %p32 = scmp.eq.s32.totalorder %s18, 0
      %p33 = por %p31, %p32
      %p34 = scmp.ne.s32.totalorder %s26, %s28
      %p35 = scmp.eq.s32.totalorder %s23, 3
      %p36 = por %p34, %p35
      %p37 = scmp.ne.s32.totalorder %s28, %s29
      %p38 = scmp.eq.s32.totalorder %s23, 0
      %p39 = por %p37, %p38
      %p40 = scmp.ne.s32.totalorder %s28, %s29
      %p41 = scmp.eq.s32.totalorder %s24, 3
      %p42 = por %p40, %p41
      %p44 = scmp.ne.s32.totalorder %s29, %s43
      %p45 = scmp.eq.s32.totalorder %s24, 0
      %p46 = por %p44, %p45
      %s47 = ssub.s32 %s18, %s25
      %p48 = scmp.eq.s32.totalorder %s47, 0
      %s50 = sadd.s32 %s49, 1
      %s51 = scalar_select %p48, %s49, %s50
      %p54 = pneg %p48
      %p55 = scmp.eq.s32.totalorder %s18, 3
      %p56 = por %p54, %p55
      %p57 = scmp.ne.s32.totalorder %s49, %s52
      %p58 = scmp.eq.s32.totalorder %s18, 0
      %p59 = por %p57, %p58
      %p60 = scmp.ne.s32.totalorder %s49, %s52
      %p61 = scmp.eq.s32.totalorder %s23, 3
      %p62 = por %p60, %p61
      %p63 = scmp.ne.s32.totalorder %s52, %s53
      %p64 = scmp.eq.s32.totalorder %s23, 0
      %p65 = por %p63, %p64
      %p66 = scmp.ne.s32.totalorder %s52, %s53
      %p67 = scmp.eq.s32.totalorder %s24, 3
      %p68 = por %p66, %p67
      %p70 = scmp.ne.s32.totalorder %s53, %s69
      %p71 = scmp.eq.s32.totalorder %s24, 0
      %p72 = por %p70, %p71
      %s73 = ssub.s32 %s18, %s25
      %p74 = scmp.eq.s32.totalorder %s73, 0
      %s76 = sadd.s32 %s75, 1
      %s77 = scalar_select %p74, %s75, %s76
      %p80 = pneg %p74
      %p81 = scmp.eq.s32.totalorder %s18, 3
      %p82 = por %p80, %p81
      %p83 = scmp.ne.s32.totalorder %s75, %s78
      %p84 = scmp.eq.s32.totalorder %s18, 0
      %p85 = por %p83, %p84
      %p86 = scmp.ne.s32.totalorder %s75, %s78
      %p87 = scmp.eq.s32.totalorder %s23, 3
      %p88 = por %p86, %p87
      %p89 = scmp.ne.s32.totalorder %s78, %s79
      %p90 = scmp.eq.s32.totalorder %s23, 0
      %p91 = por %p89, %p90
      %p92 = scmp.ne.s32.totalorder %s78, %s79
      %p93 = scmp.eq.s32.totalorder %s24, 3
      %p94 = por %p92, %p93
      %p96 = scmp.ne.s32.totalorder %s79, %s95
      %p97 = scmp.eq.s32.totalorder %s24, 0
      %p98 = por %p96, %p97
      %s100 = sadd.s32 %s99, 1
      %p103 = scmp.eq.s32.totalorder %s18, 3
      %p104 = scmp.ne.s32.totalorder %s99, %s101
      %p105 = scmp.eq.s32.totalorder %s18, 0
      %p106 = por %p104, %p105
      %p107 = scmp.ne.s32.totalorder %s99, %s101
      %p108 = scmp.eq.s32.totalorder %s23, 3
      %p109 = por %p107, %p108
      %p110 = scmp.ne.s32.totalorder %s101, %s102
      %p111 = scmp.eq.s32.totalorder %s23, 0
      %p112 = por %p110, %p111
      %p113 = scmp.ne.s32.totalorder %s101, %s102
      %p114 = scmp.eq.s32.totalorder %s24, 3
      %p115 = por %p113, %p114
      %p117 = scmp.ne.s32.totalorder %s102, %s116
      %p118 = scmp.eq.s32.totalorder %s24, 0
      %p119 = por %p117, %p118
      %s121 = sadd.s32 %s120, 1
      %p124 = scmp.eq.s32.totalorder %s18, 3
      %p125 = scmp.ne.s32.totalorder %s120, %s122
      %p126 = scmp.eq.s32.totalorder %s18, 0
      %p127 = por %p125, %p126
      %p128 = scmp.ne.s32.totalorder %s120, %s122
      %p129 = scmp.eq.s32.totalorder %s23, 3
      %p130 = por %p128, %p129
      %p131 = scmp.ne.s32.totalorder %s122, %s123
      %p132 = scmp.eq.s32.totalorder %s23, 0
      %p133 = por %p131, %p132
      %p134 = scmp.ne.s32.totalorder %s122, %s123
      %p135 = scmp.eq.s32.totalorder %s24, 3
      %p136 = por %p134, %p135
      %p138 = scmp.ne.s32.totalorder %s123, %s137
      %p139 = scmp.eq.s32.totalorder %s24, 0
      %p140 = por %p138, %p139
      %s141 = ssub.s32 %s18, %s25
      %p142 = scmp.eq.s32.totalorder %s141, 0
      %s144 = sadd.s32 %s143, 1
      %s145 = scalar_select %p142, %s143, %s144
      %p148 = pneg %p142
      %p149 = scmp.eq.s32.totalorder %s18, 3
      %p150 = por %p148, %p149
      %p151 = scmp.ne.s32.totalorder %s143, %s146
      %p152 = scmp.eq.s32.totalorder %s18, 0
      %p153 = por %p151, %p152
      %p154 = scmp.ne.s32.totalorder %s143, %s146
      %p155 = scmp.eq.s32.totalorder %s23, 3
      %p156 = por %p154, %p155
      %p157 = scmp.ne.s32.totalorder %s146, %s147
      %p158 = scmp.eq.s32.totalorder %s23, 0
      %p159 = por %p157, %p158
      %p160 = scmp.ne.s32.totalorder %s146, %s147
      %p161 = scmp.eq.s32.totalorder %s24, 3
      %p162 = por %p160, %p161
      %p164 = scmp.ne.s32.totalorder %s147, %s163
      %p165 = scmp.eq.s32.totalorder %s24, 0
      %p166 = por %p164, %p165
      %p167 = scmp.le.s32.totalorder 1, %s18
      %p168 = scmp.lt.s32.totalorder %s18, 5
      %p169 = pnand %p167, %p168
      %p170 = pneg %p169
      // Predicated region
      $region9: #{tpu_custom_call.1} parent=5 // pred_check
        _
      $region10: #{tpu_custom_call.1} parent=5 // pred_check_branch
        %172 = sbr.rel (%p169) target = $region12
      $region11: #{tpu_custom_call.1} parent=5 // pred_region
        %s173 = ssub.s32 %s18, 1
        // Predicated region
        $region13: #{tpu_custom_call.1} parent=11 // pred_check
          %p174 = pneg %p39
        $region14: #{tpu_custom_call.1} parent=11 // pred_check_branch
          %176 = sbr.rel (%p174) target = $region16
        $region15: #{tpu_custom_call.1} parent=11 // pred_region
          %s178 = ssub.s32 32, 32
          %179 = vsyncadd [#allocation3], %s178
          %s181 = sshll.u32 [#allocation2], 4
          %s182 = int_to_ptr.vmem [resolvable:$true] %s181
          %184 = dma.hbm_to_vmem [thread:$0]  %s0, 32, %s182, [#allocation3]
        $region16: #{tpu_custom_call.1} parent=11 // pred_fallthru
          _
        // Predicated region
        $region17: #{tpu_custom_call.1} parent=11 // pred_check
          %p185 = pneg %p112
        $region18: #{tpu_custom_call.1} parent=11 // pred_check_branch
          %187 = sbr.rel (%p185) target = $region20
        $region19: #{tpu_custom_call.1} parent=11 // pred_region
          _
        $region20: #{tpu_custom_call.1} parent=11 // pred_fallthru
          _
        // Predicated region
        $region21: #{tpu_custom_call.1} parent=11 // pred_check
          %p188 = pneg %p133
        $region22: #{tpu_custom_call.1} parent=11 // pred_check_branch
          %190 = sbr.rel (%p188) target = $region24
        $region23: #{tpu_custom_call.1} parent=11 // pred_region
          _
        $region24: #{tpu_custom_call.1} parent=11 // pred_fallthru
          _
      $region12: #{tpu_custom_call.1} parent=5 // pred_fallthru
        _
      %p191 = scmp.lt.s32.totalorder %s18, 4
      // Predicated region
      $region25: #{tpu_custom_call.1} parent=5 // pred_check
        %p192 = pneg %p191
      $region26: #{tpu_custom_call.1} parent=5 // pred_check_branch
        %194 = sbr.rel (%p192) target = $region28
      $region27: #{tpu_custom_call.1} parent=5 // pred_region
        // Predicated region
        $region29: #{tpu_custom_call.1} parent=27 // pred_check
          %p195 = pneg %p59
        $region30: #{tpu_custom_call.1} parent=27 // pred_check_branch
          %197 = sbr.rel (%p195) target = $region32
        $region31: #{tpu_custom_call.1} parent=27 // pred_region
          %s198 = sand.u32 %s49, 1
          %s199 = scalar_lea.sflag [#allocation6], %s198
          %s200 = sand.u32 %s49, 1
          %s201 = smul.addr %s200, 128
          %s202 = scalar_lea.vmem [#allocation5], %s201
          %s204 = ssub.s32 2048, 2048
          %205 = vsyncadd %s199, %s204
          %s206 = smul.addr %s18, 32
          %s207 = smul.addr %s206, 64
          %s208 = scalar_lea.hbm %s1, %s207
          %s209 = sshll.u32 %s202, 4
          %s210 = int_to_ptr.vmem [resolvable:$true] %s209
          %215 = dma.hbm_to_vmem [thread:$0]  %s208, 2048, %s210, %s199, 64, 64, 4
        $region32: #{tpu_custom_call.1} parent=27 // pred_fallthru
          _
        // Predicated region
        $region33: #{tpu_custom_call.1} parent=27 // pred_check
          %p216 = pneg %p85
        $region34: #{tpu_custom_call.1} parent=27 // pred_check_branch
          %218 = sbr.rel (%p216) target = $region36
        $region35: #{tpu_custom_call.1} parent=27 // pred_region
          %p219 = scmp.lt.s32.totalorder %s18, 3
          %s220 = scalar_select %p219, %s18, 3
          %s221 = scalar_lea.vmem %s2, %s220
        $region36: #{tpu_custom_call.1} parent=27 // pred_fallthru
          _
      $region28: #{tpu_custom_call.1} parent=5 // pred_fallthru
        _
      %p222 = scmp.le.s32.totalorder 1, %s18
      %p223 = scmp.lt.s32.totalorder %s18, 5
      %p224 = pnand %p222, %p223
      %p225 = pneg %p224
      // Predicated region
      $region37: #{tpu_custom_call.1} parent=5 // pred_check
        _
      $region38: #{tpu_custom_call.1} parent=5 // pred_check_branch
        %227 = sbr.rel (%p224) target = $region40
      $region39: #{tpu_custom_call.1} parent=5 // pred_region
        %s228 = ssub.s32 %s18, 1
        // Predicated region
        $region41: #{tpu_custom_call.1} parent=39 // pred_check
          %p229 = pneg %p39
        $region42: #{tpu_custom_call.1} parent=39 // pred_check_branch
          %231 = sbr.rel (%p229) target = $region44
        $region43: #{tpu_custom_call.1} parent=39 // pred_region
          %232 = dma.done [#allocation3], 32
        $region44: #{tpu_custom_call.1} parent=39 // pred_fallthru
          _
        %s233 = sand.u32 %s52, 1
        %s234 = scalar_lea.sflag [#allocation6], %s233
        %s235 = sand.u32 %s52, 1
        %s236 = smul.addr %s235, 128
        %s237 = scalar_lea.vmem [#allocation5], %s236
        // Predicated region
        $region45: #{tpu_custom_call.1} parent=39 // pred_check
          %p238 = pneg %p65
        $region46: #{tpu_custom_call.1} parent=39 // pred_check_branch
          %240 = sbr.rel (%p238) target = $region48
        $region47: #{tpu_custom_call.1} parent=39 // pred_region
          %241 = dma.done %s234, 2048
        $region48: #{tpu_custom_call.1} parent=39 // pred_fallthru
          _
        %p242 = pneg %p39
        %p243 = pneg %p36
        %s244 = sand.u32 %s52, 1
        %s245 = scalar_lea.sflag [#allocation6], %s244
        %s246 = sand.u32 %s52, 1
        %s247 = smul.addr %s246, 128
        %s248 = scalar_lea.vmem [#allocation5], %s247
        %p249 = pneg %p65
        %p250 = pneg %p62
        %p251 = scmp.lt.s32.totalorder %s23, 3
        %s252 = scalar_select %p251, %s23, 3
        %s253 = scalar_lea.vmem %s2, %s252
        %p254 = pneg %p91
        %p255 = pneg %p88
        %p256 = pneg %p112
        %p257 = pneg %p109
        %p258 = pneg %p133
        %p259 = pneg %p130
        %p260 = pneg %p159
        %p261 = pneg %p156
        %s262 = sand.u32 %s146, 1
        %s263 = scalar_lea.sflag [#allocation4], %s262
        %s264 = sand.u32 %s146, 1
        %s265 = scalar_lea.vmem [#allocation7], %s264
        %p266 = scmp.lt.s32.totalorder %s23, 3
        %s267 = scalar_select %p266, %s23, 3
        %s268 = scalar_lea.vmem %s2, %s267
        %v270 = vld [vmem:[#allocation2] sm:$0x3]
        %v271 = vld [vmem:[%s237] sm:$0xf]
        %v272 = vld [vmem:[%s237 + $0x4] sm:$0xf]
        %v273 = vld [vmem:[%s237 + $0x8] sm:$0xf]
        %v274 = vld [vmem:[%s237 + $0xc] sm:$0xf]
        %v275 = vld [vmem:[%s237 + $0x10] sm:$0xf]
        %v276 = vld [vmem:[%s237 + $0x14] sm:$0xf]
        %v277 = vld [vmem:[%s237 + $0x18] sm:$0xf]
        %v278 = vld [vmem:[%s237 + $0x1c] sm:$0xf]
        %v279 = vld [vmem:[%s237 + $0x20] sm:$0xf]
        %v280 = vld [vmem:[%s237 + $0x24] sm:$0xf]
        %v281 = vld [vmem:[%s237 + $0x28] sm:$0xf]
        %v282 = vld [vmem:[%s237 + $0x2c] sm:$0xf]
        %v283 = vld [vmem:[%s237 + $0x30] sm:$0xf]
        %v284 = vld [vmem:[%s237 + $0x34] sm:$0xf]
        %v285 = vld [vmem:[%s237 + $0x38] sm:$0xf]
        %v286 = vld [vmem:[%s237 + $0x3c] sm:$0xf]
        %v287 = vld [vmem:[%s237 + $0x40] sm:$0xf]
        %v288 = vld [vmem:[%s237 + $0x44] sm:$0xf]
        %v289 = vld [vmem:[%s237 + $0x48] sm:$0xf]
        %v290 = vld [vmem:[%s237 + $0x4c] sm:$0xf]
        %v291 = vld [vmem:[%s237 + $0x50] sm:$0xf]
        %v292 = vld [vmem:[%s237 + $0x54] sm:$0xf]
        %v293 = vld [vmem:[%s237 + $0x58] sm:$0xf]
        %v294 = vld [vmem:[%s237 + $0x5c] sm:$0xf]
        %v295 = vld [vmem:[%s237 + $0x60] sm:$0xf]
        %v296 = vld [vmem:[%s237 + $0x64] sm:$0xf]
        %v297 = vld [vmem:[%s237 + $0x68] sm:$0xf]
        %v298 = vld [vmem:[%s237 + $0x6c] sm:$0xf]
        %v299 = vld [vmem:[%s237 + $0x70] sm:$0xf]
        %v300 = vld [vmem:[%s237 + $0x74] sm:$0xf]
        %v301 = vld [vmem:[%s237 + $0x78] sm:$0xf]
        %v302 = vld [vmem:[%s237 + $0x7c] sm:$0xf]
        %v303 = vld [vmem:[%s268] sm:$0x1]
        %v305 = vlaneseq
        %v306 = vshrl.u32 %v305, 7
        %v307 = vsub.s32 0, %v306
        %v308 = vrot.slane %v303, %v307
        %v312 = vunpack.c.l.s4 1966171168
        %v313 = vunpack.c.0.s8 %v312
        %v314 = vlaneseq
        %v315 = vshrl.u32 %v314, 7
        %v316 = vsub.s32 %v313, %v315
        %v317 = vrot.slane %v270, %v316
        %v318 = vcombine.high %v317, %v317
        %v320 = vunpack.c.l.s4 1966171168
        %v321 = vunpack.c.0.s8 %v320
        %v322 = vlaneseq
        %v323 = vshrl.u32 %v322, 7
        %v324 = vsub.s32 %v321, %v323
        %v325 = vrot.slane %v317, %v324
        %v327 = vunpack.c.l.s4 1966171168
        %v328 = vunpack.c.0.s8 %v327
        %v329 = vlaneseq
        %v330 = vshrl.u32 %v329, 7
        %v331 = vsub.s32 %v328, %v330
        %v332 = vrot.slane %v318, %v331
        %v367 = vunpack.c.l.b16 %v271
        %v368 = vunpack.c.l.b16 %v272
        %v369 = vunpack.c.l.b16 %v273
        %v370 = vunpack.c.l.b16 %v274
        %v371 = vunpack.c.l.b16 %v275
        %v372 = vunpack.c.l.b16 %v276
        %v373 = vunpack.c.l.b16 %v277
        %v374 = vunpack.c.l.b16 %v278
        %v375 = vunpack.c.l.b16 %v279
        %v376 = vunpack.c.l.b16 %v280
        %v377 = vunpack.c.l.b16 %v281
        %v378 = vunpack.c.l.b16 %v282
        %v379 = vunpack.c.l.b16 %v283
        %v380 = vunpack.c.l.b16 %v284
        %v381 = vunpack.c.l.b16 %v285
        %v382 = vunpack.c.l.b16 %v286
        %v383 = vunpack.c.l.b16 %v287
        %v384 = vunpack.c.l.b16 %v288
        %v385 = vunpack.c.l.b16 %v289
        %v386 = vunpack.c.l.b16 %v290
        %v387 = vunpack.c.l.b16 %v291
        %v388 = vunpack.c.l.b16 %v292
        %v389 = vunpack.c.l.b16 %v293
        %v390 = vunpack.c.l.b16 %v294
        %v391 = vunpack.c.l.b16 %v295
        %v392 = vunpack.c.l.b16 %v296
        %v393 = vunpack.c.l.b16 %v297
        %v394 = vunpack.c.l.b16 %v298
        %v395 = vunpack.c.l.b16 %v299
        %v396 = vunpack.c.l.b16 %v300
        %v397 = vunpack.c.l.b16 %v301
        %v398 = vunpack.c.l.b16 %v302
        %v399 = vpack.c.b16 %v368, %v367
        %v400 = vpack.c.b16 %v370, %v369
        %v401 = vpack.c.b16 %v372, %v371
        %v402 = vpack.c.b16 %v374, %v373
        %v403 = vpack.c.b16 %v376, %v375
        %v404 = vpack.c.b16 %v378, %v377
        %v405 = vpack.c.b16 %v380, %v379
        %v406 = vpack.c.b16 %v382, %v381
        %v407 = vpack.c.b16 %v384, %v383
        %v408 = vpack.c.b16 %v386, %v385
        %v409 = vpack.c.b16 %v388, %v387
        %v410 = vpack.c.b16 %v390, %v389
        %v411 = vpack.c.b16 %v392, %v391
        %v412 = vpack.c.b16 %v394, %v393
        %v413 = vpack.c.b16 %v396, %v395
        %v414 = vpack.c.b16 %v398, %v397
        %431 = vmatprep.subr.bf16.mxu0 0
        %432 = vmatpush1.bf16.msra.mxu0 %v399
        %433 = vmatprep.subr.bf16.mxu0 0
        %434 = vmatpush1.bf16.msra.mxu0 %v400
        %435 = vmatprep.subr.bf16.mxu0 0
        %436 = vmatpush1.bf16.msra.mxu0 %v401
        %437 = vmatprep.subr.bf16.mxu0 0
        %438 = vmatpush1.bf16.msra.mxu0 %v402
        %439 = vmatprep.subr.bf16.mxu0 0
        %440 = vmatpush1.bf16.msra.mxu0 %v403
        %441 = vmatprep.subr.bf16.mxu0 0
        %442 = vmatpush1.bf16.msra.mxu0 %v404
        %443 = vmatprep.subr.bf16.mxu0 0
        %444 = vmatpush1.bf16.msra.mxu0 %v405
        %445 = vmatprep.subr.bf16.mxu0 0
        %446 = vmatpush1.bf16.msra.mxu0 %v406
        %447 = vmatprep.subr.bf16.mxu0 0
        %448 = vmatpush1.bf16.msra.mxu0 %v407
        %449 = vmatprep.subr.bf16.mxu0 0
        %450 = vmatpush1.bf16.msra.mxu0 %v408
        %451 = vmatprep.subr.bf16.mxu0 0
        %452 = vmatpush1.bf16.msra.mxu0 %v409
        %453 = vmatprep.subr.bf16.mxu0 0
        %454 = vmatpush1.bf16.msra.mxu0 %v410
        %455 = vmatprep.subr.bf16.mxu0 0
        %456 = vmatpush1.bf16.msra.mxu0 %v411
        %457 = vmatprep.subr.bf16.mxu0 0
        %458 = vmatpush1.bf16.msra.mxu0 %v412
        %459 = vmatprep.subr.bf16.mxu0 0
        %460 = vmatpush1.bf16.msra.mxu0 %v413
        %461 = vmatprep.subr.bf16.mxu0 0
        %462 = vmatpush1.bf16.msra.mxu0 %v414
        %463 = vmatprep.mubr.bf16.mxu0 %v332
        %464 = vmatmul.mubr.bf16.gmra.mrb[0].mxu0 %v325
        %v465 = vpop.f32.mrb[0].mxu0
        %v466 = vadd.f32 %v308, %v465
        %v467 = vpop.f32.mrb[0].mxu0
        %v468 = vpop.f32.mrb[0].mxu0
        %v469 = vpop.f32.mrb[0].mxu0
        %470 = vdwg.mxu0
        %vm471 = vcmask 1041408
        %v472 = vsel %vm471, %v466, 0.0
        %473 = vadd.xlane.f32.xlu0 %v472
        %v474 = vpop.xlane.xlu0 %473
        %v475 = vmul.f32 %v474, 0.0078125
        %v476 = vsub.f32 %v466, %v475
        %v477 = vmul.f32 %v476, %v476
        %v478 = vsel %vm471, %v477, 0.0
        %479 = vadd.xlane.f32.xlu0 %v478
        %v480 = vpop.xlane.xlu0 %479
        %v481 = vmul.f32 %v480, 0.0078125
        %v482 = vadd.f32 %v481, 1e-05
        %v483 = vrsqrt.pop %v482
        %v484 = vmul.f32 %v476, %v483
        %v485 = vld [vmem:[%s3] sm:$0x1]
        %v487 = vlaneseq
        %v488 = vshrl.u32 %v487, 7
        %v489 = vsub.s32 0, %v488
        %v490 = vrot.slane %v485, %v489
        %v492 = vmul.f32 %v484, %v490
        %v493 = vld [vmem:[%s4] sm:$0x1]
        %v495 = vlaneseq
        %v496 = vshrl.u32 %v495, 7
        %v497 = vsub.s32 0, %v496
        %v498 = vrot.slane %v493, %v497
        %v500 = vadd.f32 %v492, %v498
        %v501 = vpack.c.bf16 %v500, %v500
        %502 = vst [vmem:[%s265] sm:$0x1] %v501
        %s503 = sand.u32 %s146, 1
        %s504 = scalar_lea.sflag [#allocation4], %s503
        %s505 = sand.u32 %s146, 1
        %s506 = scalar_lea.vmem [#allocation7], %s505
        // Predicated region
        $region49: #{tpu_custom_call.1} parent=39 // pred_check
          %p507 = pneg %p156
        $region50: #{tpu_custom_call.1} parent=39 // pred_check_branch
          %509 = sbr.rel (%p507) target = $region52
        $region51: #{tpu_custom_call.1} parent=39 // pred_region
          %s511 = ssub.s32 16, 16
          %512 = vsyncadd %s504, %s511
          %s513 = smul.addr %s23, 16
          %s514 = scalar_lea.hbm %s5, %s513
          %s516 = sshll.u32 %s506, 4
          %s517 = int_to_ptr.vmem [resolvable:$true] %s516
          %519 = dma.vmem_to_hbm [thread:$0]  %s517, 16, %s514, %s504
        $region52: #{tpu_custom_call.1} parent=39 // pred_fallthru
          _
      $region40: #{tpu_custom_call.1} parent=5 // pred_fallthru
        _
      %p520 = scmp.le.s32.totalorder 2, %s18
      // Predicated region
      $region53: #{tpu_custom_call.1} parent=5 // pred_check
        %p521 = pneg %p520
      $region54: #{tpu_custom_call.1} parent=5 // pred_check_branch
        %523 = sbr.rel (%p521) target = $region56
      $region55: #{tpu_custom_call.1} parent=5 // pred_region
        %s524 = ssub.s32 %s18, 2
        // Predicated region
        $region57: #{tpu_custom_call.1} parent=55 // pred_check
          %p525 = pneg %p162
        $region58: #{tpu_custom_call.1} parent=55 // pred_check_branch
          %527 = sbr.rel (%p525) target = $region60
        $region59: #{tpu_custom_call.1} parent=55 // pred_region
          %s528 = sand.u32 %s147, 1
          %s529 = scalar_lea.sflag [#allocation4], %s528
          %s530 = sand.u32 %s147, 1
          %s531 = scalar_lea.vmem [#allocation7], %s530
          %532 = dma.done %s529, 16
        $region60: #{tpu_custom_call.1} parent=55 // pred_fallthru
          _
      $region56: #{tpu_custom_call.1} parent=5 // pred_fallthru
        _
    $region6: #{tpu_custom_call.1} parent=1 // loop_footer
      %s22 = sadd.s32 1, %s18
    $region7: #{tpu_custom_call.1} parent=1 // loop_footer_branch
      %17 = sbr.rel target = $region3
    $region8: #{tpu_custom_call.1} parent=1 // loop_exit
      _
    %533 = vsyncpa [#allocation3], 1
    %s534 = scalar_lea.sflag [#allocation3], 1
    %535 = vsyncpa %s534, 1
    %536 = vsyncpa [#allocation6], 1
    %s537 = scalar_lea.sflag [#allocation6], 1
    %538 = vsyncpa %s537, 1
    %539 = vsyncpa [#allocation4], 1
    %s540 = scalar_lea.sflag [#allocation4], 1
    %541 = vsyncpa %s540, 1

</llo_original>
